<compile_context>
chip_gen: v6e
topology: v6e:2x2x1
jax: 0.10.0
libtpu: 0.0.40
codegen_flags: <defaults>
</compile_context>

<pallas_src>
import functools

import jax
import jax.numpy as jnp
from jax.experimental import pallas as pl
from jax.experimental.pallas import tpu as pltpu


def _round_up(x, m):
    return ((x + m - 1) // m) * m


def _cdiv(a, b):
    return -(-a // b)


def _vmem_capacity_bytes():
    try:
        return int(pltpu.get_tpu_info().vmem_capacity_bytes)
    except Exception:
        return 64 * 1024 * 1024  # v7x floor; safe lower bound for budgeting


def _const_block_spec(shape):
    """Grid-invariant operand: single-buffered when the API supports it."""
    index_map = lambda i: (0,) * len(shape)
    try:
        return pl.BlockSpec(shape, index_map, pipeline_mode=pl.Buffered(1))
    except Exception:  # older API without pipeline_mode / Buffered
        return pl.BlockSpec(shape, index_map)


def _patch_merging_kernel(x_ref, g_ref, b_ref, w_ref, o_ref, *, eps, r, c4,
                          matmul_dtype):
    # x_ref: (tm/r, r*4C)  r merged-patch rows packed per physical row
    # g/b:   (1, r*4C)     LayerNorm affine, tiled r times
    # w_ref: (r*4C, r*2C)  block-diagonal reduction weight (r copies of w)
    # o_ref: (tm/r, r*2C)  lane-dense output slab
    x = x_ref[...].astype(jnp.float32)

    # Per-4C-segment LayerNorm (static unroll; r is 1 or 128 // 2C).
    segs = []
    for t in range(r):
        seg = x[:, t * c4:(t + 1) * c4]
        mean = jnp.mean(seg, axis=-1, keepdims=True)
        var = jnp.mean((seg - mean) ** 2, axis=-1, keepdims=True)
        segs.append((seg - mean) * jax.lax.rsqrt(var + eps))
    xn = segs[0] if r == 1 else jnp.concatenate(segs, axis=-1)
    xn = xn * g_ref[...].astype(jnp.float32) + b_ref[...].astype(jnp.float32)

    w = w_ref[...]
    if matmul_dtype is not None:
        xn = xn.astype(matmul_dtype)
        w = w.astype(matmul_dtype)
    else:
        w = w.astype(jnp.float32)

    o_ref[...] = jnp.dot(
        xn, w, preferred_element_type=jnp.float32
    ).astype(o_ref.dtype)


def patch_merging(x, gamma, beta, w, *, eps=1e-5, row_tile=512,
                  matmul_dtype=None):
    """PatchMerging forward.

    x:     (B, L, C) with L % 4 == 0 (the reference .view requires it)
    gamma: (4C,)   LayerNorm weight
    beta:  (4C,)   LayerNorm bias
    w:     (4C, 2C) reduction weight (nn.Linear without bias), laid out (in, out)
    matmul_dtype: optional (e.g. jnp.bfloat16) for the MXU operands; default
                  None keeps exact f32 parity with the PyTorch reference.
    returns (B, L // 4, 2C)
    """
    B, L, C = x.shape
    assert L % 4 == 0, f"L={L} must be divisible by 4"
    C4, C2 = 4 * C, 2 * C
    M = B * (L // 4)

    # Exact equivalent of the even/odd slice + concat + view of the reference.
    xm = x.reshape(M, C4)

    # Lane-dense output packing factor.
    if C2 < 128 and 128 % C2 == 0:
        r = 128 // C2          # packed output width == exactly 128 lanes
    else:
        r = 1                  # 2C >= 128: stores already span full vregs
    row_align = 8 * r          # one sublane row of packed rows

    itm = jnp.dtype(x.dtype).itemsize
    wtm = jnp.dtype(w.dtype).itemsize
    vmem_cap = _vmem_capacity_bytes()

    def working_set(tm_rows):
        tile_in = 2 * tm_rows * C4 * itm                       # double-buffered x
        tile_out = 2 * tm_rows * C2 * itm                      # double-buffered out
        consts = (r * C4) * (r * C2) * wtm + 2 * (r * C4) * 4  # single-buffered
        f32_tmp = 2 * tm_rows * C4 * 4                         # in-kernel f32 temps
        return tile_in + tile_out + consts + f32_tmp

    # Fixed row tile + padded grid: no whole-array fallback.
    tm = max(row_align, min(_round_up(row_tile, row_align), _round_up(M, row_align)))
    while tm > row_align and working_set(tm) > vmem_cap // 2:
        tm = max(row_align, _round_up(tm // 2, row_align))
    # Keep >= 2 parallel grid steps when there is enough work (v7x: 2 TCs).
    if _cdiv(M, tm) < 2 and M > row_align:
        tm = max(row_align, _round_up(_cdiv(M, 2), row_align))

    M_pad = _round_up(M, tm)
    grid = (M_pad // tm,)
    if M_pad != M:
        xm = jnp.pad(xm, ((0, M_pad - M), (0, 0)))  # zero rows -> finite LN output

    # Free row-major relabels into the packed layout.
    x_in = xm.reshape(M_pad // r, r * C4)
    g_in = jnp.tile(gamma.astype(jnp.float32), r).reshape(1, r * C4)
    b_in = jnp.tile(beta.astype(jnp.float32), r).reshape(1, r * C4)
    if r == 1:
        w_in = w
    else:
        w_in = jnp.zeros((r * C4, r * C2), w.dtype)
        for t in range(r):
            w_in = w_in.at[t * C4:(t + 1) * C4, t * C2:(t + 1) * C2].set(w)

    vmem_limit = int(min(max(2 * working_set(tm), 32 * 1024 * 1024),
                         (vmem_cap * 9) // 10))

    out = pl.pallas_call(
        functools.partial(_patch_merging_kernel, eps=eps, r=r, c4=C4,
                          matmul_dtype=matmul_dtype),
        out_shape=jax.ShapeDtypeStruct((M_pad // r, r * C2), x.dtype),
        grid=grid,
        in_specs=[
            pl.BlockSpec((tm // r, r * C4), lambda i: (i, 0)),
            _const_block_spec((1, r * C4)),
            _const_block_spec((1, r * C4)),
            _const_block_spec((r * C4, r * C2)),
        ],
        out_specs=pl.BlockSpec((tm // r, r * C2), lambda i: (i, 0)),
        compiler_params=pltpu.CompilerParams(
            dimension_semantics=("parallel",),
            vmem_limit_bytes=vmem_limit),
    )(x_in, g_in, b_in, w_in)

    out = out.reshape(M_pad, C2)[:M]
    return out.reshape(B, L // 4, C2)


# ------------------------- pure-JAX reference --------------------------------
def patch_merging_ref(x, gamma, beta, w, eps=1e-5):
    B, L, C = x.shape
    x0 = x[:, 0::2, :]
    x1 = x[:, 1::2, :]
    xc = jnp.concatenate([x0, x1], axis=-1).reshape(B, L // 4, 4 * C)
    mean = jnp.mean(xc, axis=-1, keepdims=True)
    var = jnp.mean((xc - mean) ** 2, axis=-1, keepdims=True)
    xn = (xc - mean) * jax.lax.rsqrt(var + eps)
    xn = xn * gamma + beta
    return jnp.einsum("blk,kn->bln", xn, w)


# ---------------------------------- main --------------------------------------
if __name__ == "__main__":
    key = jax.random.PRNGKey(0)
    k_x, k_g, k_b, k_w = jax.random.split(key, 4)

    # Small shapes consistent with the Swin config this module comes from:
    # input_resolution L = 56, dim C = 32 -> 4C = 128 (lane aligned), 2C = 64.
    B, L, C = 2, 56, 32
    x = jax.random.normal(k_x, (B, L, C), jnp.float32)
    gamma = 1.0 + 0.02 * jax.random.normal(k_g, (4 * C,), jnp.float32)
    beta = 0.02 * jax.random.normal(k_b, (4 * C,), jnp.float32)
    w = 0.02 * jax.random.normal(k_w, (4 * C, 2 * C), jnp.float32)

    out = jax.jit(patch_merging)(x, gamma, beta, w)
    out = jax.block_until_ready(out)

    assert out.shape == (B, L // 4, 2 * C), out.shape
    assert bool(jnp.all(jnp.isfinite(out)))

    ref = patch_merging_ref(x, gamma, beta, w)
    assert bool(jnp.allclose(out, ref, rtol=1e-5, atol=1e-5)), (
        float(jnp.max(jnp.abs(out - ref))))

    print("KERNEL_OK")
</pallas_src>

<mosaic_0001>
module attributes {stable_mosaic.version = 11 : i64} {
  func.func @_patch_merging_kernel(%arg0: i32, %arg1: memref<8x256xf32, #tpu.memory_space<vmem>>, %arg2: memref<1x256xf32, #tpu.memory_space<vmem>>, %arg3: memref<1x256xf32, #tpu.memory_space<vmem>>, %arg4: memref<256x128xf32, #tpu.memory_space<vmem>>, %arg5: memref<8x128xf32, #tpu.memory_space<vmem>>) attributes {dimension_semantics = [#tpu.dimension_semantics<parallel>], iteration_bounds = array<i64: 2>, scalar_prefetch = 0 : i64, scratch_operands = 0 : i64, tpu.core_type = #tpu.core_type<tc>, window_params = [{transform_indices = @transform_0, window_bounds = array<i64: 8, 256>}, {pipeline_mode = #tpu.pipeline_mode<synchronous>, transform_indices = @transform_1, window_bounds = array<i64: 1, 256>}, {pipeline_mode = #tpu.pipeline_mode<synchronous>, transform_indices = @transform_2, window_bounds = array<i64: 1, 256>}, {pipeline_mode = #tpu.pipeline_mode<synchronous>, transform_indices = @transform_3, window_bounds = array<i64: 256, 128>}, {transform_indices = @transform_4, window_bounds = array<i64: 8, 128>}]} {
    %c0 = arith.constant 0 : index
    %c0_0 = arith.constant 0 : index
    %0 = vector.load %arg1[%c0, %c0_0] : memref<8x256xf32, #tpu.memory_space<vmem>>, vector<8x256xf32>
    %1 = vector.extract_strided_slice %0 {offsets = [0, 0], sizes = [8, 128], strides = [1, 1]} : vector<8x256xf32> to vector<8x128xf32>
    %cst = arith.constant dense<0.000000e+00> : vector<8xf32>
    %2 = vector.multi_reduction <add>, %1, %cst [1] : vector<8x128xf32> to vector<8xf32>
    %3 = vector.shape_cast %2 : vector<8xf32> to vector<8x1xf32>
    %cst_1 = arith.constant 1.280000e+02 : f32
    %4 = vector.broadcast %cst_1 : f32 to vector<8x1xf32>
    %5 = arith.divf %3, %4 : vector<8x1xf32>
    %6 = vector.broadcast %5 : vector<8x1xf32> to vector<8x128xf32>
    %7 = arith.subf %1, %6 : vector<8x128xf32>
    %8 = arith.mulf %7, %7 : vector<8x128xf32>
    %cst_2 = arith.constant dense<0.000000e+00> : vector<8xf32>
    %9 = vector.multi_reduction <add>, %8, %cst_2 [1] : vector<8x128xf32> to vector<8xf32>
    %10 = vector.shape_cast %9 : vector<8xf32> to vector<8x1xf32>
    %cst_3 = arith.constant 1.280000e+02 : f32
    %11 = vector.broadcast %cst_3 : f32 to vector<8x1xf32>
    %12 = arith.divf %10, %11 : vector<8x1xf32>
    %13 = vector.broadcast %5 : vector<8x1xf32> to vector<8x128xf32>
    %14 = arith.subf %1, %13 : vector<8x128xf32>
    %cst_4 = arith.constant 9.99999974E-6 : f32
    %15 = vector.broadcast %cst_4 : f32 to vector<8x1xf32>
    %16 = arith.addf %12, %15 : vector<8x1xf32>
    %17 = math.rsqrt %16 : vector<8x1xf32>
    %18 = vector.broadcast %17 : vector<8x1xf32> to vector<8x128xf32>
    %19 = arith.mulf %14, %18 : vector<8x128xf32>
    %20 = vector.extract_strided_slice %0 {offsets = [0, 128], sizes = [8, 128], strides = [1, 1]} : vector<8x256xf32> to vector<8x128xf32>
    %cst_5 = arith.constant dense<0.000000e+00> : vector<8xf32>
    %21 = vector.multi_reduction <add>, %20, %cst_5 [1] : vector<8x128xf32> to vector<8xf32>
    %22 = vector.shape_cast %21 : vector<8xf32> to vector<8x1xf32>
    %cst_6 = arith.constant 1.280000e+02 : f32
    %23 = vector.broadcast %cst_6 : f32 to vector<8x1xf32>
    %24 = arith.divf %22, %23 : vector<8x1xf32>
    %25 = vector.broadcast %24 : vector<8x1xf32> to vector<8x128xf32>
    %26 = arith.subf %20, %25 : vector<8x128xf32>
    %27 = arith.mulf %26, %26 : vector<8x128xf32>
    %cst_7 = arith.constant dense<0.000000e+00> : vector<8xf32>
    %28 = vector.multi_reduction <add>, %27, %cst_7 [1] : vector<8x128xf32> to vector<8xf32>
    %29 = vector.shape_cast %28 : vector<8xf32> to vector<8x1xf32>
    %cst_8 = arith.constant 1.280000e+02 : f32
    %30 = vector.broadcast %cst_8 : f32 to vector<8x1xf32>
    %31 = arith.divf %29, %30 : vector<8x1xf32>
    %32 = vector.broadcast %24 : vector<8x1xf32> to vector<8x128xf32>
    %33 = arith.subf %20, %32 : vector<8x128xf32>
    %cst_9 = arith.constant 9.99999974E-6 : f32
    %34 = vector.broadcast %cst_9 : f32 to vector<8x1xf32>
    %35 = arith.addf %31, %34 : vector<8x1xf32>
    %36 = math.rsqrt %35 : vector<8x1xf32>
    %37 = vector.broadcast %36 : vector<8x1xf32> to vector<8x128xf32>
    %38 = arith.mulf %33, %37 : vector<8x128xf32>
    %39 = tpu.concatenate %19, %38 in 1 : vector<8x128xf32>, vector<8x128xf32> -> vector<8x256xf32>
    %c0_10 = arith.constant 0 : index
    %c0_11 = arith.constant 0 : index
    %40 = vector.load %arg2[%c0_10, %c0_11] : memref<1x256xf32, #tpu.memory_space<vmem>>, vector<1x256xf32>
    %41 = vector.broadcast %40 : vector<1x256xf32> to vector<8x256xf32>
    %42 = arith.mulf %39, %41 : vector<8x256xf32>
    %c0_12 = arith.constant 0 : index
    %c0_13 = arith.constant 0 : index
    %43 = vector.load %arg3[%c0_12, %c0_13] : memref<1x256xf32, #tpu.memory_space<vmem>>, vector<1x256xf32>
    %44 = vector.broadcast %43 : vector<1x256xf32> to vector<8x256xf32>
    %45 = arith.addf %42, %44 : vector<8x256xf32>
    %c0_14 = arith.constant 0 : index
    %c0_15 = arith.constant 0 : index
    %46 = vector.load %arg4[%c0_14, %c0_15] : memref<256x128xf32, #tpu.memory_space<vmem>>, vector<256x128xf32>
    %cst_16 = arith.constant dense<0.000000e+00> : vector<8x128xf32>
    %47 = tpu.matmul %45, %46, %cst_16 {dimension_numbers = #tpu.dot_dimension_numbers<[1], [0], [0], [1], [0, 0, 1, 1], [], []>} : vector<8x256xf32>, vector<256x128xf32>, vector<8x128xf32> -> vector<8x128xf32>
    %c0_17 = arith.constant 0 : index
    %c0_18 = arith.constant 0 : index
    %48 = vector.load %arg5[%c0_17, %c0_18] : memref<8x128xf32, #tpu.memory_space<vmem>>, vector<8x128xf32>
    tpu.vector_store %arg5[%c0_17, %c0_18], %47 {strides = array<i32>} : memref<8x128xf32, #tpu.memory_space<vmem>>, vector<8x128xf32>,
    return
  }
  func.func @transform_0(%arg0: i32) -> (i32, i32) {
    %c0_i32 = arith.constant 0 : i32
    %c0_i32_0 = arith.constant 0 : i32
    return %arg0, %c0_i32 : i32, i32
  }
  func.func @transform_1(%arg0: i32) -> (i32, i32) {
    %c0_i32 = arith.constant 0 : i32
    %c0_i32_0 = arith.constant 0 : i32
    %c0_i32_1 = arith.constant 0 : i32
    return %c0_i32, %c0_i32_0 : i32, i32
  }
  func.func @transform_2(%arg0: i32) -> (i32, i32) {
    %c0_i32 = arith.constant 0 : i32
    %c0_i32_0 = arith.constant 0 : i32
    %c0_i32_1 = arith.constant 0 : i32
    return %c0_i32, %c0_i32_0 : i32, i32
  }
  func.func @transform_3(%arg0: i32) -> (i32, i32) {
    %c0_i32 = arith.constant 0 : i32
    %c0_i32_0 = arith.constant 0 : i32
    %c0_i32_1 = arith.constant 0 : i32
    return %c0_i32, %c0_i32_0 : i32, i32
  }
  func.func @transform_4(%arg0: i32) -> (i32, i32) {
    %c0_i32 = arith.constant 0 : i32
    %c0_i32_0 = arith.constant 0 : i32
    return %arg0, %c0_i32 : i32, i32
  }
}

</mosaic_0001>

<llo_original>
// kernel: tile.13
$region0: #{tile.13}
  #allocation0 [shape = 's32[1]{0}', space=sflag, size = 0x4, scoped, tag = 'scoped memory for tile.13']
  %s0 = inlined_call_operand.vmem [shape: f32[128], index: 0, kind: input, shape index: {}]
  %s1 = inlined_call_operand.vmem [shape: f32[2,128], index: 1, kind: output, shape index: {}]
  // Predicated region
  $region2: #{tile.13} parent=0 // pred_check
    _
  $region3: #{tile.13} parent=0 // pred_check_branch
    %3 = sbr.rel (0) target = $region5
  $region4: #{tile.13} parent=0 // pred_region
    _
  $region5: #{tile.13} parent=0 // pred_fallthru
    _
  %v4 = vld [vmem:[%s0] ss:$0 sm:$0xff]
  %5 = vst [vmem:[%s1] sm:$0x3] %v4

// kernel: patch_merging.1
$region0: #{patch_merging.1}
  #allocation0 [shape = 'u32[]', space=smem, size = 0x4, offset = 0x4, fixed_abs, tag = 'smem constant byte address 0x4 - core index']
  #allocation1 [shape = 'u32[144,128]{1,0:T(1,128)}', space=vmem, size = 0x12000, scoped, tag = 'internal scratch']
  %s0 = inlined_call_operand.vmem [shape: f32[16,256], index: 0, kind: input, shape index: {}]
  %s1 = inlined_call_operand.vmem [shape: f32[1,256], index: 1, kind: input, shape index: {}]
  %s2 = inlined_call_operand.vmem [shape: f32[1,256], index: 2, kind: input, shape index: {}]
  %s3 = inlined_call_operand.vmem [shape: f32[256,128], index: 3, kind: input, shape index: {}]
  %s4 = inlined_call_operand.vmem [shape: f32[16,128], index: 4, kind: output, shape index: {}]
  %s5 = sld [smem:[#allocation0]]
  $region49: #{patch_merging.1} parent=0
    _
  %s7 = ssub.s32 1, %s5
  %s8 = scalar_select 0, %s7, %s5
  loop: start=0, step=1, limit=4
  $region2: #{patch_merging.1} parent=0 // loop_pre_header
    _
  $region3: #{patch_merging.1} parent=0 // loop_header
    %s10 = sphi 0, %s14
    %p11 = scmp.ge.s32.totalorder %s10, 4
    %s20 = sphi 0, %s22
    %s23 = sphi 0, %s20
    %s24 = sphi 0, %s23
    %s40 = sphi 0, %s24
    %s44 = sphi 0, %s44
    %s46 = sphi 0, %s44
    %s47 = sphi 0, %s46
    %s61 = sphi 0, %s47
    %s65 = sphi 0, %s65
    %s67 = sphi 0, %s65
    %s68 = sphi 0, %s67
    %s82 = sphi 0, %s68
    %s86 = sphi 0, %s86
    %s88 = sphi 0, %s86
    %s89 = sphi 0, %s88
    %s103 = sphi 0, %s89
    %s109 = sphi 0, %s111
    %s112 = sphi 0, %s109
    %s113 = sphi 0, %s112
    %s129 = sphi 0, %s113
  $region4: #{patch_merging.1} parent=0 // loop_header_branch
    %13 = sbr.rel (%p11) target = $region8
  $region5: #{patch_merging.1} parent=0 // loop_body
    %s15 = ssub.s32 %s10, 1
    %s16 = ssub.s32 %s10, 2
    %s17 = sadd.s32 %s10, 1
    %s18 = ssub.s32 %s10, %s17
    %p19 = scmp.eq.s32.totalorder %s18, 0
    %s21 = sadd.s32 %s20, 1
    %s22 = scalar_select %p19, %s20, %s21
    %p25 = pneg %p19
    %p26 = scmp.eq.s32.totalorder %s10, 1
    %p27 = por %p25, %p26
    %p28 = scmp.ne.s32.totalorder %s20, %s23
    %p29 = scmp.eq.s32.totalorder %s10, 0
    %p30 = por %p28, %p29
    %p31 = scmp.ne.s32.totalorder %s20, %s23
    %p32 = scmp.eq.s32.totalorder %s15, 1
    %p33 = por %p31, %p32
    %p34 = scmp.ne.s32.totalorder %s23, %s24
    %p35 = scmp.eq.s32.totalorder %s15, 0
    %p36 = por %p34, %p35
    %p37 = scmp.ne.s32.totalorder %s23, %s24
    %p38 = scmp.eq.s32.totalorder %s16, 1
    %p39 = por %p37, %p38
    %p41 = scmp.ne.s32.totalorder %s24, %s40
    %p42 = scmp.eq.s32.totalorder %s16, 0
    %p43 = por %p41, %p42
    %s45 = sadd.s32 %s44, 1
    %p48 = scmp.eq.s32.totalorder %s10, 1
    %p49 = scmp.ne.s32.totalorder %s44, %s46
    %p50 = scmp.eq.s32.totalorder %s10, 0
    %p51 = por %p49, %p50
    %p52 = scmp.ne.s32.totalorder %s44, %s46
    %p53 = scmp.eq.s32.totalorder %s15, 1
    %p54 = por %p52, %p53
    %p55 = scmp.ne.s32.totalorder %s46, %s47
    %p56 = scmp.eq.s32.totalorder %s15, 0
    %p57 = por %p55, %p56
    %p58 = scmp.ne.s32.totalorder %s46, %s47
    %p59 = scmp.eq.s32.totalorder %s16, 1
    %p60 = por %p58, %p59
    %p62 = scmp.ne.s32.totalorder %s47, %s61
    %p63 = scmp.eq.s32.totalorder %s16, 0
    %p64 = por %p62, %p63
    %s66 = sadd.s32 %s65, 1
    %p69 = scmp.eq.s32.totalorder %s10, 1
    %p70 = scmp.ne.s32.totalorder %s65, %s67
    %p71 = scmp.eq.s32.totalorder %s10, 0
    %p72 = por %p70, %p71
    %p73 = scmp.ne.s32.totalorder %s65, %s67
    %p74 = scmp.eq.s32.totalorder %s15, 1
    %p75 = por %p73, %p74
    %p76 = scmp.ne.s32.totalorder %s67, %s68
    %p77 = scmp.eq.s32.totalorder %s15, 0
    %p78 = por %p76, %p77
    %p79 = scmp.ne.s32.totalorder %s67, %s68
    %p80 = scmp.eq.s32.totalorder %s16, 1
    %p81 = por %p79, %p80
    %p83 = scmp.ne.s32.totalorder %s68, %s82
    %p84 = scmp.eq.s32.totalorder %s16, 0
    %p85 = por %p83, %p84
    %s87 = sadd.s32 %s86, 1
    %p90 = scmp.eq.s32.totalorder %s10, 1
    %p91 = scmp.ne.s32.totalorder %s86, %s88
    %p92 = scmp.eq.s32.totalorder %s10, 0
    %p93 = por %p91, %p92
    %p94 = scmp.ne.s32.totalorder %s86, %s88
    %p95 = scmp.eq.s32.totalorder %s15, 1
    %p96 = por %p94, %p95
    %p97 = scmp.ne.s32.totalorder %s88, %s89
    %p98 = scmp.eq.s32.totalorder %s15, 0
    %p99 = por %p97, %p98
    %p100 = scmp.ne.s32.totalorder %s88, %s89
    %p101 = scmp.eq.s32.totalorder %s16, 1
    %p102 = por %p100, %p101
    %p104 = scmp.ne.s32.totalorder %s89, %s103
    %p105 = scmp.eq.s32.totalorder %s16, 0
    %p106 = por %p104, %p105
    %s107 = ssub.s32 %s10, %s17
    %p108 = scmp.eq.s32.totalorder %s107, 0
    %s110 = sadd.s32 %s109, 1
    %s111 = scalar_select %p108, %s109, %s110
    %p114 = pneg %p108
    %p115 = scmp.eq.s32.totalorder %s10, 1
    %p116 = por %p114, %p115
    %p117 = scmp.ne.s32.totalorder %s109, %s112
    %p118 = scmp.eq.s32.totalorder %s10, 0
    %p119 = por %p117, %p118
    %p120 = scmp.ne.s32.totalorder %s109, %s112
    %p121 = scmp.eq.s32.totalorder %s15, 1
    %p122 = por %p120, %p121
    %p123 = scmp.ne.s32.totalorder %s112, %s113
    %p124 = scmp.eq.s32.totalorder %s15, 0
    %p125 = por %p123, %p124
    %p126 = scmp.ne.s32.totalorder %s112, %s113
    %p127 = scmp.eq.s32.totalorder %s16, 1
    %p128 = por %p126, %p127
    %p130 = scmp.ne.s32.totalorder %s113, %s129
    %p131 = scmp.eq.s32.totalorder %s16, 0
    %p132 = por %p130, %p131
    %p133 = scmp.le.s32.totalorder 1, %s10
    %p134 = scmp.lt.s32.totalorder %s10, 3
    %p135 = pnand %p133, %p134
    %p136 = pneg %p135
    // Predicated region
    $region9: #{patch_merging.1} parent=5 // pred_check
      _
    $region10: #{patch_merging.1} parent=5 // pred_check_branch
      %138 = sbr.rel (%p135) target = $region12
    $region11: #{patch_merging.1} parent=5 // pred_region
      %s139 = ssub.s32 %s10, 1
      // Predicated region
      $region13: #{patch_merging.1} parent=11 // pred_check
        %p140 = pneg %p57
      $region14: #{patch_merging.1} parent=11 // pred_check_branch
        %142 = sbr.rel (%p140) target = $region16
      $region15: #{patch_merging.1} parent=11 // pred_region
        _
      $region16: #{patch_merging.1} parent=11 // pred_fallthru
        _
      // Predicated region
      $region17: #{patch_merging.1} parent=11 // pred_check
        %p143 = pneg %p78
      $region18: #{patch_merging.1} parent=11 // pred_check_branch
        %145 = sbr.rel (%p143) target = $region20
      $region19: #{patch_merging.1} parent=11 // pred_region
        _
      $region20: #{patch_merging.1} parent=11 // pred_fallthru
        _
      // Predicated region
      $region21: #{patch_merging.1} parent=11 // pred_check
        %p146 = pneg %p99
      $region22: #{patch_merging.1} parent=11 // pred_check_branch
        %148 = sbr.rel (%p146) target = $region24
      $region23: #{patch_merging.1} parent=11 // pred_region
        _
      $region24: #{patch_merging.1} parent=11 // pred_fallthru
        _
    $region12: #{patch_merging.1} parent=5 // pred_fallthru
      _
    %p149 = scmp.lt.s32.totalorder %s10, 2
    // Predicated region
    $region25: #{patch_merging.1} parent=5 // pred_check
      %p150 = pneg %p149
    $region26: #{patch_merging.1} parent=5 // pred_check_branch
      %152 = sbr.rel (%p150) target = $region28
    $region27: #{patch_merging.1} parent=5 // pred_region
      // Predicated region
      $region29: #{patch_merging.1} parent=27 // pred_check
        %p153 = pneg %p30
      $region30: #{patch_merging.1} parent=27 // pred_check_branch
        %155 = sbr.rel (%p153) target = $region32
      $region31: #{patch_merging.1} parent=27 // pred_region
        %p156 = scmp.lt.s32.totalorder %s10, 1
        %s157 = scalar_select %p156, %s10, 1
        %s158 = smul.addr %s157, 2
        %s159 = smul.addr %s158, 8
        %s160 = scalar_lea.vmem %s0, %s159
      $region32: #{patch_merging.1} parent=27 // pred_fallthru
        _
    $region28: #{patch_merging.1} parent=5 // pred_fallthru
      _
    %p161 = scmp.le.s32.totalorder 1, %s10
    %p162 = scmp.lt.s32.totalorder %s10, 3
    %p163 = pnand %p161, %p162
    %p164 = pneg %p163
    // Predicated region
    $region33: #{patch_merging.1} parent=5 // pred_check
      _
    $region34: #{patch_merging.1} parent=5 // pred_check_branch
      %166 = sbr.rel (%p163) target = $region36
    $region35: #{patch_merging.1} parent=5 // pred_region
      %s167 = ssub.s32 %s10, 1
      %p168 = scmp.lt.s32.totalorder %s15, 1
      %s169 = scalar_select %p168, %s15, 1
      %s170 = smul.addr %s169, 2
      %s171 = smul.addr %s170, 8
      %s172 = scalar_lea.vmem %s0, %s171
      %p173 = pneg %p36
      %p174 = pneg %p33
      %p175 = pneg %p57
      %p176 = pneg %p54
      %p177 = pneg %p78
      %p178 = pneg %p75
      %p179 = pneg %p99
      %p180 = pneg %p96
      %p181 = pneg %p125
      %p182 = pneg %p122
      %p183 = scmp.lt.s32.totalorder %s15, 1
      %s184 = scalar_select %p183, %s15, 1
      %s185 = smul.addr %s184, 8
      %s186 = scalar_lea.vmem %s4, %s185
      %p187 = scmp.lt.s32.totalorder %s15, 1
      %s188 = scalar_select %p187, %s15, 1
      %s189 = smul.addr %s188, 2
      %s190 = smul.addr %s189, 8
      %s191 = scalar_lea.vmem %s0, %s190
      %p192 = scmp.lt.s32.totalorder %s15, 1
      %s193 = scalar_select %p192, %s15, 1
      %s194 = smul.addr %s193, 8
      %s195 = scalar_lea.vmem %s4, %s194
      %v196 = vld [vmem:[%s191] sm:$0xff]
      %v197 = vld [vmem:[%s191 + $0x8] sm:$0xff]
      %198 = vadd.xlane.f32.xlu0 %v196
      %v199 = vpop.xlane.xlu0 %198
      %v200 = vrcp.pop 128.0
      %v201 = vmul.f32 %v199, %v200
      %v202 = vsub.f32 %v196, %v201
      %v203 = vmul.f32 %v202, %v202
      %204 = vadd.xlane.f32.xlu0 %v203
      %v205 = vpop.xlane.xlu0 %204
      %v206 = vmul.f32 %v205, %v200
      %v207 = vadd.f32 %v206, 1e-05
      %v208 = vrsqrt.pop %v207
      %v209 = vmul.f32 %v202, %v208
      %210 = vadd.xlane.f32.xlu0 %v197
      %v211 = vpop.xlane.xlu0 %210
      %v212 = vmul.f32 %v211, %v200
      %v213 = vsub.f32 %v197, %v212
      %v214 = vmul.f32 %v213, %v213
      %215 = vadd.xlane.f32.xlu0 %v214
      %v216 = vpop.xlane.xlu0 %215
      %v217 = vmul.f32 %v216, %v200
      %v218 = vadd.f32 %v217, 1e-05
      %v219 = vrsqrt.pop %v218
      %v220 = vmul.f32 %v213, %v219
      %v221 = vld [vmem:[%s1] sm:$0x3]
      %v223 = vlaneseq
      %v224 = vshrl.u32 %v223, 7
      %v225 = vsub.s32 0, %v224
      %v226 = vrot.slane %v221, %v225
      %v227 = vlaneseq
      %v228 = vshrl.u32 %v227, 7
      %v229 = vsub.s32 1, %v228
      %v230 = vrot.slane %v221, %v229
      %v233 = vmul.f32 %v209, %v226
      %v234 = vmul.f32 %v220, %v230
      %v235 = vld [vmem:[%s2] sm:$0x3]
      %v237 = vlaneseq
      %v238 = vshrl.u32 %v237, 7
      %v239 = vsub.s32 0, %v238
      %v240 = vrot.slane %v235, %v239
      %v241 = vlaneseq
      %v242 = vshrl.u32 %v241, 7
      %v243 = vsub.s32 1, %v242
      %v244 = vrot.slane %v235, %v243
      %v247 = vadd.f32 %v233, %v240
      %v248 = vadd.f32 %v234, %v244
      %v249 = vld [vmem:[%s3] sm:$0xff]
      %v250 = vld [vmem:[%s3 + $0x8] sm:$0xff]
      %v251 = vld [vmem:[%s3 + $0x10] sm:$0xff]
      %v252 = vld [vmem:[%s3 + $0x18] sm:$0xff]
      %v253 = vld [vmem:[%s3 + $0x20] sm:$0xff]
      %v254 = vld [vmem:[%s3 + $0x28] sm:$0xff]
      %v255 = vld [vmem:[%s3 + $0x30] sm:$0xff]
      %v256 = vld [vmem:[%s3 + $0x38] sm:$0xff]
      %v257 = vld [vmem:[%s3 + $0x40] sm:$0xff]
      %v258 = vld [vmem:[%s3 + $0x48] sm:$0xff]
      %v259 = vld [vmem:[%s3 + $0x50] sm:$0xff]
      %v260 = vld [vmem:[%s3 + $0x58] sm:$0xff]
      %v261 = vld [vmem:[%s3 + $0x60] sm:$0xff]
      %v262 = vld [vmem:[%s3 + $0x68] sm:$0xff]
      %v263 = vld [vmem:[%s3 + $0x70] sm:$0xff]
      %v264 = vld [vmem:[%s3 + $0x78] sm:$0xff]
      %v265 = vld [vmem:[%s3 + $0x80] sm:$0xff]
      %v266 = vld [vmem:[%s3 + $0x88] sm:$0xff]
      %v267 = vld [vmem:[%s3 + $0x90] sm:$0xff]
      %v268 = vld [vmem:[%s3 + $0x98] sm:$0xff]
      %v269 = vld [vmem:[%s3 + $0xa0] sm:$0xff]
      %v270 = vld [vmem:[%s3 + $0xa8] sm:$0xff]
      %v271 = vld [vmem:[%s3 + $0xb0] sm:$0xff]
      %v272 = vld [vmem:[%s3 + $0xb8] sm:$0xff]
      %v273 = vld [vmem:[%s3 + $0xc0] sm:$0xff]
      %v274 = vld [vmem:[%s3 + $0xc8] sm:$0xff]
      %v275 = vld [vmem:[%s3 + $0xd0] sm:$0xff]
      %v276 = vld [vmem:[%s3 + $0xd8] sm:$0xff]
      %v277 = vld [vmem:[%s3 + $0xe0] sm:$0xff]
      %v278 = vld [vmem:[%s3 + $0xe8] sm:$0xff]
      %v279 = vld [vmem:[%s3 + $0xf0] sm:$0xff]
      %v280 = vld [vmem:[%s3 + $0xf8] sm:$0xff]
      %281 = vmatprep.subr.mxu0 0.0
      %282 = vmatpush1.msra.mxu0 %v264
      %283 = vmatprep.subr.mxu0 0.0
      %284 = vmatpush1.msra.mxu0 %v263
      %285 = vmatprep.subr.mxu0 0.0
      %286 = vmatpush1.msra.mxu0 %v262
      %287 = vmatprep.subr.mxu0 0.0
      %288 = vmatpush1.msra.mxu0 %v261
      %289 = vmatprep.subr.mxu0 0.0
      %290 = vmatpush1.msra.mxu0 %v260
      %291 = vmatprep.subr.mxu0 0.0
      %292 = vmatpush1.msra.mxu0 %v259
      %293 = vmatprep.subr.mxu0 0.0
      %294 = vmatpush1.msra.mxu0 %v258
      %295 = vmatprep.subr.mxu0 0.0
      %296 = vmatpush1.msra.mxu0 %v257
      %297 = vmatprep.subr.mxu0 0.0
      %298 = vmatpush1.msra.mxu0 %v256
      %299 = vmatprep.subr.mxu0 0.0
      %300 = vmatpush1.msra.mxu0 %v255
      %301 = vmatprep.subr.mxu0 0.0
      %302 = vmatpush1.msra.mxu0 %v254
      %303 = vmatprep.subr.mxu0 0.0
      %304 = vmatpush1.msra.mxu0 %v253
      %305 = vmatprep.subr.mxu0 0.0
      %306 = vmatpush1.msra.mxu0 %v252
      %307 = vmatprep.subr.mxu0 0.0
      %308 = vmatpush1.msra.mxu0 %v251
      %309 = vmatprep.subr.mxu0 0.0
      %310 = vmatpush1.msra.mxu0 %v250
      %311 = vmatprep.subr.mxu0 0.0
      %312 = vmatpush1.msra.mxu0 %v249
      %313 = vmatprep.subr.mxu0 0.0
      %314 = vmatpush2.msra.mxu0 %v280
      %315 = vmatprep.subr.mxu0 0.0
      %316 = vmatpush2.msra.mxu0 %v279
      %317 = vmatprep.subr.mxu0 0.0
      %318 = vmatpush2.msra.mxu0 %v278
      %319 = vmatprep.subr.mxu0 0.0
      %320 = vmatpush2.msra.mxu0 %v277
      %321 = vmatprep.subr.mxu0 0.0
      %322 = vmatpush2.msra.mxu0 %v276
      %323 = vmatprep.subr.mxu0 0.0
      %324 = vmatpush2.msra.mxu0 %v275
      %325 = vmatprep.subr.mxu0 0.0
      %326 = vmatpush2.msra.mxu0 %v274
      %327 = vmatprep.subr.mxu0 0.0
      %328 = vmatpush2.msra.mxu0 %v273
      %329 = vmatprep.subr.mxu0 0.0
      %330 = vmatpush2.msra.mxu0 %v272
      %331 = vmatprep.subr.mxu0 0.0
      %332 = vmatpush2.msra.mxu0 %v271
      %333 = vmatprep.subr.mxu0 0.0
      %334 = vmatpush2.msra.mxu0 %v270
      %335 = vmatprep.subr.mxu0 0.0
      %336 = vmatpush2.msra.mxu0 %v269
      %337 = vmatprep.subr.mxu0 0.0
      %338 = vmatpush2.msra.mxu0 %v268
      %339 = vmatprep.subr.mxu0 0.0
      %340 = vmatpush2.msra.mxu0 %v267
      %341 = vmatprep.subr.mxu0 0.0
      %342 = vmatpush2.msra.mxu0 %v266
      %343 = vmatprep.subr.mxu0 0.0
      %344 = vmatpush2.msra.mxu0 %v265
      %345 = vmatprep.mubr.f32.mxu0 %v248
      %346 = vmatmul.mubr.f32.gmra.mxu0 %v247
      %v347 = vpop.f32.mrf.mxu0
      %v348 = vadd.f32 0.0, %v347
      %v349 = vpop.f32.mrf.mxu0
      %350 = vdwg.mxu0
      %351 = vst [vmem:[%s195] sm:$0xff] %v348
      %p352 = scmp.lt.s32.totalorder %s15, 1
      %s353 = scalar_select %p352, %s15, 1
      %s354 = smul.addr %s353, 8
      %s355 = scalar_lea.vmem %s4, %s354
      // Predicated region
      $region37: #{patch_merging.1} parent=35 // pred_check
        %p356 = pneg %p122
      $region38: #{patch_merging.1} parent=35 // pred_check_branch
        %358 = sbr.rel (%p356) target = $region40
      $region39: #{patch_merging.1} parent=35 // pred_region
        _
      $region40: #{patch_merging.1} parent=35 // pred_fallthru
        _
    $region36: #{patch_merging.1} parent=5 // pred_fallthru
      _
    %p359 = scmp.le.s32.totalorder 2, %s10
    // Predicated region
    $region41: #{patch_merging.1} parent=5 // pred_check
      %p360 = pneg %p359
    $region42: #{patch_merging.1} parent=5 // pred_check_branch
      %362 = sbr.rel (%p360) target = $region44
    $region43: #{patch_merging.1} parent=5 // pred_region
      %s363 = ssub.s32 %s10, 2
      // Predicated region
      $region45: #{patch_merging.1} parent=43 // pred_check
        %p364 = pneg %p128
      $region46: #{patch_merging.1} parent=43 // pred_check_branch
        %366 = sbr.rel (%p364) target = $region48
      $region47: #{patch_merging.1} parent=43 // pred_region
        %p367 = scmp.lt.s32.totalorder %s16, 1
        %s368 = scalar_select %p367, %s16, 1
        %s369 = smul.addr %s368, 8
        %s370 = scalar_lea.vmem %s4, %s369
      $region48: #{patch_merging.1} parent=43 // pred_fallthru
        _
    $region44: #{patch_merging.1} parent=5 // pred_fallthru
      _
  $region6: #{patch_merging.1} parent=0 // loop_footer
    %s14 = sadd.s32 1, %s10
  $region7: #{patch_merging.1} parent=0 // loop_footer_branch
    %9 = sbr.rel target = $region3
  $region8: #{patch_merging.1} parent=0 // loop_exit
    _

</llo_original>
